<compile_context>
chip_gen: v7x
topology: tpu7x:2x2x1
jax: 0.10.0
libtpu: 0.0.40
codegen_flags: <defaults>
</compile_context>

<pallas_src>
import functools

import jax
import jax.numpy as jnp
from jax.experimental import pallas as pl
from jax.experimental.pallas import tpu as pltpu


def _round_up(a, b):
    return (a + b - 1) // b * b


def _cdiv(a, b):
    return (a + b - 1) // b


def _tpu_vmem_capacity_bytes():
    """Physical VMEM capacity; conservative fallback if the query is unavailable."""
    try:
        info = pltpu.get_tpu_info()
        cap = getattr(info, "vmem_capacity_bytes", None)
        if cap:
            return int(cap)
    except Exception:
        pass
    return 64 * 1024 * 1024  # v7x per-TC size: safe lower bound for all gens


# ---------------------------------------------------------------------------
# Kernels
# ---------------------------------------------------------------------------
def _patch_embed_kernel_single_k(p_ref, w_ref, b_ref, o_ref):
    """Common case: K fits one tile.  No scratch accumulator, single store."""
    acc = jnp.dot(p_ref[...], w_ref[...], preferred_element_type=jnp.float32)
    o_ref[...] = (acc + b_ref[...]).astype(o_ref.dtype)


def _patch_embed_kernel_multi_k(p_ref, w_ref, b_ref, o_ref, acc_ref, *, tk):
    """K-split fallback: f32 VMEM accumulator; full weight resident in VMEM."""
    k = pl.program_id(1)

    @pl.when(k == 0)
    def _init():
        # Fold the bias into the accumulator init: no per-step bias add.
        acc_ref[...] = jnp.broadcast_to(b_ref[...], acc_ref.shape)

    koff = pl.multiple_of(k * tk, 128)
    acc_ref[...] += jnp.dot(p_ref[...], w_ref[pl.ds(koff, tk), :],
                            preferred_element_type=jnp.float32)

    @pl.when(k == pl.num_programs(1) - 1)
    def _flush():
        o_ref[...] = acc_ref[...].astype(o_ref.dtype)


# ---------------------------------------------------------------------------
# Wrapper
# ---------------------------------------------------------------------------
def patch_embed(x, weight, bias, patch_size, *, compute_dtype=None,
                tm=None, tk=None):
    """x: (B, C, H, W) or (B, H, W) like the PyTorch module.

    weight: (E, C, P, P) Conv2d weight, bias: (E,). Returns (B, num_patches, E)
    in x.dtype.  compute_dtype is what feeds the MXU (default bf16 for f32
    inputs; accumulation is always f32).  tm / tk override the auto tiles and
    are snapped to (8, 128) legality.
    """
    if x.ndim == 3:  # match the module's unsqueeze(1)
        x = x[:, None, :, :]
    B, C, H, W = x.shape
    P = int(patch_size)
    E = weight.shape[0]
    Nh, Nw = H // P, W // P
    M = B * Nh * Nw
    K = C * P * P

    out_dtype = x.dtype
    if compute_dtype is None:
        # bf16 operands hit the MXU fast path on v5e/v6e/v7x and halve the HBM
        # stream; f32 accumulation keeps the accuracy loss tiny.
        compute_dtype = jnp.bfloat16 if x.dtype == jnp.float32 else x.dtype
    cbytes = jnp.dtype(compute_dtype).itemsize
    obytes = jnp.dtype(out_dtype).itemsize

    # --- patch extraction: one cheap, lane-friendly XLA copy ----------------
    # Cast FIRST (stream compute_dtype bytes, not f32) and keep K in
    # (C, ph, pw) order so NCHW never relayouts with C=1..4 on the lane axis.
    # TODO(synk): fuse extraction into the Pallas pipeline (DMA (C, P, W)
    # slabs per (b, row) grid step, unpack in VMEM) to remove this HBM pass.
    xc = x.astype(compute_dtype)
    patches = (
        xc.reshape(B, C, Nh, P, Nw, P)
          .transpose(0, 2, 4, 1, 3, 5)                  # (B, Nh, Nw, C, P, P)
          .reshape(M, K)
    )
    w2 = weight.astype(compute_dtype).reshape(E, K).T   # (K, E), (C, ph, pw) order
    b2 = bias.astype(jnp.float32).reshape(1, E)

    # --- tiling (8/128 aligned, generation-aware VMEM budget) ---------------
    E_pad = _round_up(E, 128)                 # lane-dense output stores
    K_pad = _round_up(K, 128)

    if tk is None:
        # Weight is tiny for patch embeds -> take the whole K in one tile.
        tk = K_pad if K_pad <= 8192 else 2048
    else:
        tk = min(_round_up(tk, 128), K_pad)
    K_pad = _round_up(K_pad, tk)
    num_k = K_pad // tk
    multik = num_k > 1

    vmem_cap = _tpu_vmem_capacity_bytes()
    budget = min(vmem_cap // 2, 64 * 1024 * 1024)
    # tm-independent bytes: resident weight + bias (x2: conservative about the
    # pipeline's buffer count even for constant index_maps).
    fixed = 2 * K_pad * E_pad * cbytes + 2 * E_pad * 4
    # tm-dependent bytes: double-buffered patches + output (+ f32 acc if multik).
    per_row = 2 * tk * cbytes + 2 * E_pad * obytes + (E_pad * 4 if multik else 0)
    tm_budget = max(8, min(1024, (budget - fixed) // per_row))

    if tm is None:
        n_m_tiles = max(1, _cdiv(M, tm_budget))
        if n_m_tiles == 1 and M >= 256:
            n_m_tiles = 2      # keep >=2 M tiles so the parallel axis can
                               # shard across both v7x TensorCores
        tm = _round_up(_cdiv(M, n_m_tiles), 8)
    else:
        tm = _round_up(tm, 8)
    M_pad = _round_up(M, tm)

    # Explicit VMEM limit sized from the actual tile footprint (with headroom),
    # instead of trusting the 16/32 MiB scoped defaults.
    footprint = fixed + tm * per_row
    vmem_limit = max(32 * 1024 * 1024, int(footprint * 1.5) + (8 << 20))
    vmem_limit = min(vmem_limit, int(vmem_cap * 0.9))

    # --- padding (zeros on K for both operands: garbage * 0 can make NaN) ---
    if (M_pad, K_pad) != (M, K):
        patches = jnp.pad(patches, ((0, M_pad - M), (0, K_pad - K)))
    if (K_pad, E_pad) != (K, E):
        w2 = jnp.pad(w2, ((0, K_pad - K), (0, E_pad - E)))
    if E_pad != E:
        b2 = jnp.pad(b2, ((0, 0), (0, E_pad - E)))

    if not multik:
        out = pl.pallas_call(
            _patch_embed_kernel_single_k,
            out_shape=jax.ShapeDtypeStruct((M_pad, E_pad), out_dtype),
            grid_spec=pltpu.PrefetchScalarGridSpec(
                num_scalar_prefetch=0,
                grid=(M_pad // tm,),
                in_specs=[
                    pl.BlockSpec((tm, K_pad), lambda i: (i, 0)),      # streamed
                    pl.BlockSpec((K_pad, E_pad), lambda i: (0, 0)),   # resident
                    pl.BlockSpec((1, E_pad), lambda i: (0, 0)),       # resident
                ],
                out_specs=pl.BlockSpec((tm, E_pad), lambda i: (i, 0)),
            ),
            compiler_params=pltpu.CompilerParams(
                dimension_semantics=("parallel",),
                vmem_limit_bytes=vmem_limit),
        )(patches, w2, b2)
    else:
        out = pl.pallas_call(
            functools.partial(_patch_embed_kernel_multi_k, tk=tk),
            out_shape=jax.ShapeDtypeStruct((M_pad, E_pad), out_dtype),
            grid_spec=pltpu.PrefetchScalarGridSpec(
                num_scalar_prefetch=0,
                grid=(M_pad // tm, num_k),
                in_specs=[
                    pl.BlockSpec((tm, tk), lambda i, k: (i, k)),        # streamed
                    pl.BlockSpec((K_pad, E_pad), lambda i, k: (0, 0)),  # resident, pl.ds-sliced
                    pl.BlockSpec((1, E_pad), lambda i, k: (0, 0)),
                ],
                out_specs=pl.BlockSpec((tm, E_pad), lambda i, k: (i, 0)),
                scratch_shapes=[pltpu.VMEM((tm, E_pad), jnp.float32)],
            ),
            compiler_params=pltpu.CompilerParams(
                dimension_semantics=("parallel", "arbitrary"),
                vmem_limit_bytes=vmem_limit),
        )(patches, w2, b2)

    if (M_pad, E_pad) != (M, E):
        out = out[:M, :E]
    return out.reshape(B, Nh * Nw, E)


# ---------------------------------------------------------------------------
# Self-test
# ---------------------------------------------------------------------------
if __name__ == "__main__":
    def reference(x, weight, bias, P, compute_dtype):
        """Plain-JAX reference for the stride-P conv + flatten + transpose."""
        if x.ndim == 3:
            x = x[:, None]
        B, C, H, W = x.shape
        E = weight.shape[0]
        Nh, Nw = H // P, W // P
        patches = (
            x.astype(compute_dtype)
             .reshape(B, C, Nh, P, Nw, P)
             .transpose(0, 2, 4, 1, 3, 5)
             .reshape(B, Nh * Nw, C * P * P)
        )
        wk = weight.astype(compute_dtype).reshape(E, -1).T
        out = jnp.einsum("bnk,ke->bne", patches, wk,
                         preferred_element_type=jnp.float32)
        return (out + bias.astype(jnp.float32)).astype(x.dtype)

    key = jax.random.PRNGKey(0)

    # ---- Test 1: small canonical shapes, f32 compute, auto tiles (single-K)
    B, C, H, W, P, E = 2, 4, 16, 16, 4, 32
    k1, k2, k3, key = jax.random.split(key, 4)
    x = jax.random.normal(k1, (B, C, H, W), dtype=jnp.float32)
    w = jax.random.normal(k2, (E, C, P, P), dtype=jnp.float32) * 0.02
    b = jax.random.normal(k3, (E,), dtype=jnp.float32) * 0.02

    out = jax.block_until_ready(patch_embed(x, w, b, P, compute_dtype=jnp.float32))
    ref = reference(x, w, b, P, jnp.float32)
    assert out.shape == (B, (H // P) * (W // P), E), out.shape
    assert jnp.allclose(out, ref, atol=1e-4, rtol=1e-4)

    # ---- Test 2: K-reduction fallback path (user tm/tk) + default bf16 -----
    # K = C*P*P = 256 with tk=128 -> two reduction steps, resident weight.
    B2, C2, H2, W2, P2, E2 = 2, 4, 32, 32, 8, 32
    k1, k2, k3, key = jax.random.split(key, 4)
    x2 = jax.random.normal(k1, (B2, C2, H2, W2), dtype=jnp.float32)
    wt2 = jax.random.normal(k2, (E2, C2, P2, P2), dtype=jnp.float32) * 0.02
    bb2 = jax.random.normal(k3, (E2,), dtype=jnp.float32) * 0.02

    out2 = jax.block_until_ready(patch_embed(x2, wt2, bb2, P2, tm=32, tk=128))
    ref2 = reference(x2, wt2, bb2, P2, jnp.bfloat16)
    assert out2.shape == (B2, (H2 // P2) * (W2 // P2), E2), out2.shape
    assert jnp.allclose(out2, ref2, atol=2e-2, rtol=2e-2)

    # ---- Test 3: 3-D spectrogram input (C=1 via unsqueeze), fully auto -----
    B3, H3, W3, P3, E3 = 2, 64, 64, 16, 128
    k1, k2, k3, key = jax.random.split(key, 4)
    x3 = jax.random.normal(k1, (B3, H3, W3), dtype=jnp.float32)
    wt3 = jax.random.normal(k2, (E3, 1, P3, P3), dtype=jnp.float32) * 0.02
    bb3 = jax.random.normal(k3, (E3,), dtype=jnp.float32) * 0.02

    out3 = jax.block_until_ready(patch_embed(x3, wt3, bb3, P3))
    ref3 = reference(x3, wt3, bb3, P3, jnp.bfloat16)
    assert out3.shape == (B3, (H3 // P3) * (W3 // P3), E3), out3.shape
    assert jnp.allclose(out3, ref3, atol=2e-2, rtol=2e-2)

    print("KERNEL_OK")
</pallas_src>

<mosaic_0001>
module attributes {stable_mosaic.version = 11 : i64} {
  func.func @_patch_embed_kernel_single_k(%arg0: i32, %arg1: memref<32x128xf32, #tpu.memory_space<vmem>>, %arg2: memref<128x128xf32, #tpu.memory_space<vmem>>, %arg3: memref<1x128xf32, #tpu.memory_space<vmem>>, %arg4: memref<32x128xf32, #tpu.memory_space<vmem>>) attributes {dimension_semantics = [#tpu.dimension_semantics<parallel>], iteration_bounds = array<i64: 1>, scalar_prefetch = 0 : i64, scratch_operands = 0 : i64, tpu.core_type = #tpu.core_type<tc>, window_params = [{transform_indices = @transform_0, window_bounds = array<i64: 32, 128>}, {pipeline_mode = #tpu.pipeline_mode<synchronous>, transform_indices = @transform_1, window_bounds = array<i64: 128, 128>}, {pipeline_mode = #tpu.pipeline_mode<synchronous>, transform_indices = @transform_2, window_bounds = array<i64: 1, 128>}, {transform_indices = @transform_3, window_bounds = array<i64: 32, 128>}]} {
    %c0 = arith.constant 0 : index
    %c0_0 = arith.constant 0 : index
    %0 = vector.load %arg1[%c0, %c0_0] : memref<32x128xf32, #tpu.memory_space<vmem>>, vector<32x128xf32>
    %c0_1 = arith.constant 0 : index
    %c0_2 = arith.constant 0 : index
    %1 = vector.load %arg2[%c0_1, %c0_2] : memref<128x128xf32, #tpu.memory_space<vmem>>, vector<128x128xf32>
    %cst = arith.constant dense<0.000000e+00> : vector<32x128xf32>
    %2 = tpu.matmul %0, %1, %cst {dimension_numbers = #tpu.dot_dimension_numbers<[1], [0], [0], [1], [0, 0, 1, 1], [], []>} : vector<32x128xf32>, vector<128x128xf32>, vector<32x128xf32> -> vector<32x128xf32>
    %c0_3 = arith.constant 0 : index
    %c0_4 = arith.constant 0 : index
    %3 = vector.load %arg3[%c0_3, %c0_4] : memref<1x128xf32, #tpu.memory_space<vmem>>, vector<1x128xf32>
    %4 = vector.broadcast %3 : vector<1x128xf32> to vector<32x128xf32>
    %5 = arith.addf %2, %4 : vector<32x128xf32>
    %c0_5 = arith.constant 0 : index
    %c0_6 = arith.constant 0 : index
    %6 = vector.load %arg4[%c0_5, %c0_6] : memref<32x128xf32, #tpu.memory_space<vmem>>, vector<32x128xf32>
    tpu.vector_store %arg4[%c0_5, %c0_6], %5 {strides = array<i32>} : memref<32x128xf32, #tpu.memory_space<vmem>>, vector<32x128xf32>,
    return
  }
  func.func @transform_0(%arg0: i32) -> (i32, i32) {
    %c0_i32 = arith.constant 0 : i32
    %c0_i32_0 = arith.constant 0 : i32
    return %arg0, %c0_i32 : i32, i32
  }
  func.func @transform_1(%arg0: i32) -> (i32, i32) {
    %c0_i32 = arith.constant 0 : i32
    %c0_i32_0 = arith.constant 0 : i32
    %c0_i32_1 = arith.constant 0 : i32
    return %c0_i32, %c0_i32_0 : i32, i32
  }
  func.func @transform_2(%arg0: i32) -> (i32, i32) {
    %c0_i32 = arith.constant 0 : i32
    %c0_i32_0 = arith.constant 0 : i32
    %c0_i32_1 = arith.constant 0 : i32
    return %c0_i32, %c0_i32_0 : i32, i32
  }
  func.func @transform_3(%arg0: i32) -> (i32, i32) {
    %c0_i32 = arith.constant 0 : i32
    %c0_i32_0 = arith.constant 0 : i32
    return %arg0, %c0_i32 : i32, i32
  }
}

</mosaic_0001>

<llo_original>
// kernel: tpu_custom_call.1
$region0: #{tpu_custom_call.1}
  #allocation0 [shape = 'u32[]', space=smem, size = 0x4, offset = 0x4, fixed_abs, tag = 'smem constant byte address 0x4 - core index']
  #allocation1 [shape = 'u32[144,128]{1,0:T(1,128)}', space=vmem, size = 0x12000, scoped, tag = 'internal scratch']
  %s0 = inlined_call_operand.hbm [shape: f32[32,128], index: 0, kind: input, shape index: {}]
  %s1 = inlined_call_operand.hbm [shape: f32[128,128], index: 1, kind: input, shape index: {}]
  %s2 = inlined_call_operand.vmem [shape: f32[1,128], index: 2, kind: input, shape index: {}]
  %s3 = inlined_call_operand.hbm [shape: f32[32,128], index: 3, kind: output, shape index: {}]
  %s4 = sld [smem:[#allocation0]]
  $region30: #{tpu_custom_call.1} parent=0
    _
  %s6 = ssub.s32 1, %s4
  %s7 = scalar_select 0, %s6, %s4
  $region1: #{tpu_custom_call.1} parent=0
    #allocation2 [shape = 'u8[16384]{0}', space=vmem, size = 0x4000, scoped, tag = 'input window, operand 0, single buffered']
    #allocation3 [shape = 's32[1]{0}', space=sflag, size = 0x4, scoped, tag = 'scoped memory for tpu_custom_call.1']
    #allocation4 [shape = 's32[1]{0}', space=sflag, size = 0x4, scoped, tag = 'scoped memory for tpu_custom_call.1']
    #allocation5 [shape = 'u8[65536]{0}', space=vmem, size = 0x10000, scoped, tag = 'input window, operand 1, single buffered']
    #allocation6 [shape = 's32[1]{0}', space=sflag, size = 0x4, scoped, tag = 'scoped memory for tpu_custom_call.1']
    #allocation7 [shape = 'u8[16384]{0}', space=vmem, size = 0x4000, scoped, tag = 'output window, operand 0, single buffered']
    %8 = vsyncpa [#allocation3], 0
    %9 = vsyncpa [#allocation6], 0
    %10 = vsyncpa [#allocation4], 0
    // Predicated region
    $region2: #{tpu_custom_call.1} parent=1 // pred_check
      _
    $region3: #{tpu_custom_call.1} parent=1 // pred_check_branch
      %12 = sbr.rel (0) target = $region5
    $region4: #{tpu_custom_call.1} parent=1 // pred_region
      %s14 = ssub.s32 512, 512
      %15 = vsyncadd [#allocation3], %s14
      %s16 = sshll.u32 [#allocation2], 4
      %s17 = int_to_ptr.vmem [resolvable:$true] %s16
      %22 = dma.hbm_to_vmem [thread:$0]  %s0, 512, %s17, [#allocation3], 128, 128, 8
    $region5: #{tpu_custom_call.1} parent=1 // pred_fallthru
      _
    // Predicated region
    $region6: #{tpu_custom_call.1} parent=1 // pred_check
      _
    $region7: #{tpu_custom_call.1} parent=1 // pred_check_branch
      %24 = sbr.rel (0) target = $region9
    $region8: #{tpu_custom_call.1} parent=1 // pred_region
      %s26 = ssub.s32 2048, 2048
      %27 = vsyncadd [#allocation6], %s26
      %s28 = sshll.u32 [#allocation5], 4
      %s29 = int_to_ptr.vmem [resolvable:$true] %s28
      %34 = dma.hbm_to_vmem [thread:$0]  %s1, 2048, %s29, [#allocation6], 128, 128, 8
    $region9: #{tpu_custom_call.1} parent=1 // pred_fallthru
      _
    // Predicated region
    $region10: #{tpu_custom_call.1} parent=1 // pred_check
      _
    $region11: #{tpu_custom_call.1} parent=1 // pred_check_branch
      %36 = sbr.rel (0) target = $region13
    $region12: #{tpu_custom_call.1} parent=1 // pred_region
      _
    $region13: #{tpu_custom_call.1} parent=1 // pred_fallthru
      _
    // Predicated region
    $region14: #{tpu_custom_call.1} parent=1 // pred_check
      _
    $region15: #{tpu_custom_call.1} parent=1 // pred_check_branch
      %38 = sbr.rel (0) target = $region17
    $region16: #{tpu_custom_call.1} parent=1 // pred_region
      %39 = dma.done [#allocation3], 512
    $region17: #{tpu_custom_call.1} parent=1 // pred_fallthru
      _
    // Predicated region
    $region18: #{tpu_custom_call.1} parent=1 // pred_check
      _
    $region19: #{tpu_custom_call.1} parent=1 // pred_check_branch
      %41 = sbr.rel (0) target = $region21
    $region20: #{tpu_custom_call.1} parent=1 // pred_region
      %42 = dma.done [#allocation6], 2048
    $region21: #{tpu_custom_call.1} parent=1 // pred_fallthru
      _
    %v43 = vld [vmem:[#allocation2] sm:$0xff]
    %v44 = vld [vmem:[#allocation2 + $0x8] sm:$0xff]
    %v45 = vld [vmem:[#allocation2 + $0x10] sm:$0xff]
    %v46 = vld [vmem:[#allocation2 + $0x18] sm:$0xff]
    %v47 = vld [vmem:[#allocation5] sm:$0xff]
    %v48 = vld [vmem:[#allocation5 + $0x8] sm:$0xff]
    %v49 = vld [vmem:[#allocation5 + $0x10] sm:$0xff]
    %v50 = vld [vmem:[#allocation5 + $0x18] sm:$0xff]
    %v51 = vld [vmem:[#allocation5 + $0x20] sm:$0xff]
    %v52 = vld [vmem:[#allocation5 + $0x28] sm:$0xff]
    %v53 = vld [vmem:[#allocation5 + $0x30] sm:$0xff]
    %v54 = vld [vmem:[#allocation5 + $0x38] sm:$0xff]
    %v55 = vld [vmem:[#allocation5 + $0x40] sm:$0xff]
    %v56 = vld [vmem:[#allocation5 + $0x48] sm:$0xff]
    %v57 = vld [vmem:[#allocation5 + $0x50] sm:$0xff]
    %v58 = vld [vmem:[#allocation5 + $0x58] sm:$0xff]
    %v59 = vld [vmem:[#allocation5 + $0x60] sm:$0xff]
    %v60 = vld [vmem:[#allocation5 + $0x68] sm:$0xff]
    %v61 = vld [vmem:[#allocation5 + $0x70] sm:$0xff]
    %v62 = vld [vmem:[#allocation5 + $0x78] sm:$0xff]
    %v63 = vld [vmem:[%s2] sm:$0x1]
    %v65 = vlaneseq
    %v66 = vshrl.u32 %v65, 7
    %v67 = vsub.s32 0, %v66
    %v68 = vrot.slane %v63, %v67
    %70 = vmatprep.subr.mxu0 0.0
    %71 = vmatpush1.msra.mxu0 %v47
    %72 = vmatprep.subr.mxu0 0.0
    %73 = vmatpush1.msra.mxu0 %v48
    %74 = vmatprep.subr.mxu0 0.0
    %75 = vmatpush1.msra.mxu0 %v49
    %76 = vmatprep.subr.mxu0 0.0
    %77 = vmatpush1.msra.mxu0 %v50
    %78 = vmatprep.subr.mxu0 0.0
    %79 = vmatpush1.msra.mxu0 %v51
    %80 = vmatprep.subr.mxu0 0.0
    %81 = vmatpush1.msra.mxu0 %v52
    %82 = vmatprep.subr.mxu0 0.0
    %83 = vmatpush1.msra.mxu0 %v53
    %84 = vmatprep.subr.mxu0 0.0
    %85 = vmatpush1.msra.mxu0 %v54
    %86 = vmatprep.subr.mxu0 0.0
    %87 = vmatpush1.msra.mxu0 %v55
    %88 = vmatprep.subr.mxu0 0.0
    %89 = vmatpush1.msra.mxu0 %v56
    %90 = vmatprep.subr.mxu0 0.0
    %91 = vmatpush1.msra.mxu0 %v57
    %92 = vmatprep.subr.mxu0 0.0
    %93 = vmatpush1.msra.mxu0 %v58
    %94 = vmatprep.subr.mxu0 0.0
    %95 = vmatpush1.msra.mxu0 %v59
    %96 = vmatprep.subr.mxu0 0.0
    %97 = vmatpush1.msra.mxu0 %v60
    %98 = vmatprep.subr.mxu0 0.0
    %99 = vmatpush1.msra.mxu0 %v61
    %100 = vmatprep.subr.mxu0 0.0
    %101 = vmatpush1.msra.mxu0 %v62
    %102 = vmatprep.subr.mxu0 0.0
    %103 = vmatpush1.msra.mxu0 0.0
    %104 = vmatprep.subr.mxu0 0.0
    %105 = vmatpush1.msra.mxu0 0.0
    %106 = vmatprep.subr.mxu0 0.0
    %107 = vmatpush1.msra.mxu0 0.0
    %108 = vmatprep.subr.mxu0 0.0
    %109 = vmatpush1.msra.mxu0 0.0
    %110 = vmatprep.subr.mxu0 0.0
    %111 = vmatpush1.msra.mxu0 0.0
    %112 = vmatprep.subr.mxu0 0.0
    %113 = vmatpush1.msra.mxu0 0.0
    %114 = vmatprep.subr.mxu0 0.0
    %115 = vmatpush1.msra.mxu0 0.0
    %116 = vmatprep.subr.mxu0 0.0
    %117 = vmatpush1.msra.mxu0 0.0
    %118 = vmatprep.subr.mxu0 0.0
    %119 = vmatpush1.msra.mxu0 0.0
    %120 = vmatprep.subr.mxu0 0.0
    %121 = vmatpush1.msra.mxu0 0.0
    %122 = vmatprep.subr.mxu0 0.0
    %123 = vmatpush1.msra.mxu0 0.0
    %124 = vmatprep.subr.mxu0 0.0
    %125 = vmatpush1.msra.mxu0 0.0
    %126 = vmatprep.subr.mxu0 0.0
    %127 = vmatpush1.msra.mxu0 0.0
    %128 = vmatprep.subr.mxu0 0.0
    %129 = vmatpush1.msra.mxu0 0.0
    %130 = vmatprep.subr.mxu0 0.0
    %131 = vmatpush1.msra.mxu0 0.0
    %132 = vmatprep.subr.mxu0 0.0
    %133 = vmatpush1.msra.mxu0 0.0
    %134 = vmatprep.mubr.f32.mxu0 0.0
    %135 = vmatmul.mubr.f32.gmra.mrb[0].mxu0 %v43
    %v136 = vpop.f32.mrb[0].mxu0
    %v137 = vadd.f32 %v68, %v136
    %v138 = vpop.f32.mrb[0].mxu0
    %139 = vmatprep.mubr.f32.mxu0 0.0
    %140 = vmatmul.mubr.f32.gmra.mrb[0].mxu0 %v44
    %v141 = vpop.f32.mrb[0].mxu0
    %v142 = vadd.f32 %v68, %v141
    %v143 = vpop.f32.mrb[0].mxu0
    %144 = vmatprep.mubr.f32.mxu0 0.0
    %145 = vmatmul.mubr.f32.gmra.mrb[0].mxu0 %v45
    %v146 = vpop.f32.mrb[0].mxu0
    %v147 = vadd.f32 %v68, %v146
    %v148 = vpop.f32.mrb[0].mxu0
    %149 = vmatprep.mubr.f32.mxu0 0.0
    %150 = vmatmul.mubr.f32.gmra.mrb[0].mxu0 %v46
    %v151 = vpop.f32.mrb[0].mxu0
    %v152 = vadd.f32 %v68, %v151
    %v153 = vpop.f32.mrb[0].mxu0
    %154 = vdwg.mxu0
    %155 = vst [vmem:[#allocation7] sm:$0xff] %v137
    %156 = vst [vmem:[#allocation7 + $0x8] sm:$0xff] %v142
    %157 = vst [vmem:[#allocation7 + $0x10] sm:$0xff] %v147
    %158 = vst [vmem:[#allocation7 + $0x18] sm:$0xff] %v152
    // Predicated region
    $region22: #{tpu_custom_call.1} parent=1 // pred_check
      _
    $region23: #{tpu_custom_call.1} parent=1 // pred_check_branch
      %160 = sbr.rel (0) target = $region25
    $region24: #{tpu_custom_call.1} parent=1 // pred_region
      %s162 = ssub.s32 512, 512
      %163 = vsyncadd [#allocation4], %s162
      %s164 = sshll.u32 [#allocation7], 4
      %s165 = int_to_ptr.vmem [resolvable:$true] %s164
      %170 = dma.vmem_to_hbm [thread:$0]  %s165, 512, %s3, [#allocation4], 128, 128, 8
    $region25: #{tpu_custom_call.1} parent=1 // pred_fallthru
      _
    // Predicated region
    $region26: #{tpu_custom_call.1} parent=1 // pred_check
      _
    $region27: #{tpu_custom_call.1} parent=1 // pred_check_branch
      %172 = sbr.rel (0) target = $region29
    $region28: #{tpu_custom_call.1} parent=1 // pred_region
      %173 = dma.done [#allocation4], 512
    $region29: #{tpu_custom_call.1} parent=1 // pred_fallthru
      _
    %174 = vsyncpa [#allocation3], 1
    %175 = vsyncpa [#allocation6], 1
    %176 = vsyncpa [#allocation4], 1

</llo_original>
